<compile_context>
chip_gen: v7x
topology: tpu7x:2x2x1
jax: 0.10.0
libtpu: 0.0.40
codegen_flags: <defaults>
</compile_context>

<pallas_src>
import functools
import math

import jax
import jax.numpy as jnp
from jax.experimental import pallas as pl
from jax.experimental.pallas import tpu as pltpu


# ---------------------------------------------------------------------------
# Parameter / buffer construction (glue, plain JAX — mirrors __init__)
# ---------------------------------------------------------------------------
def make_positional_encoding(d_model, max_len=5000, dtype=jnp.float32):
    position = jnp.arange(max_len, dtype=jnp.float32)[:, None]              # (max_len, 1)
    div_term = jnp.exp(
        jnp.arange(0, d_model, 2, dtype=jnp.float32) * (-math.log(10000.0) / d_model)
    )                                                                       # (d_model/2,)
    ang = position * div_term                                               # (max_len, d_model/2)
    pe = jnp.zeros((max_len, d_model), dtype=jnp.float32)
    pe = pe.at[:, 0::2].set(jnp.sin(ang))
    pe = pe.at[:, 1::2].set(jnp.cos(ang))
    return pe.astype(dtype)                                                 # (max_len, d_model)


# ---------------------------------------------------------------------------
# Kernels (operate on lane-dense (B, S*D) tiles)
# ---------------------------------------------------------------------------
def _pe_add_kernel(x_ref, pe_ref, o_ref):
    # eval mode: dropout is identity -> broadcasted add (pe row broadcast over batch)
    o_ref[...] = x_ref[...] + pe_ref[...]


def _pe_add_dropout_kernel(threshold, scale, x_ref, pe_ref, bits_ref, o_ref):
    # training mode: (x + pe) then inverted dropout.
    # keep <=> bits >= threshold, threshold = round(p * 2^32)  (P(drop) = p)
    y = x_ref[...] + pe_ref[...]
    keep = bits_ref[...] >= jnp.uint32(threshold)
    o_ref[...] = jnp.where(keep, y * scale, jnp.zeros_like(y))


# ---------------------------------------------------------------------------
# Tile-size selection: largest multiple-of-128 divisor of the flattened column
# extent that keeps the per-step working set under a VMEM budget.
# ---------------------------------------------------------------------------
def _pick_col_tile(total_cols, bytes_per_col, budget_bytes):
    if total_cols % 128 != 0:
        return total_cols                       # full extent is always a legal block dim
    max_cols = max(128, budget_bytes // max(1, bytes_per_col))
    if total_cols <= max_cols:
        return total_cols
    best = 128
    c = 256
    while c <= max_cols:
        if total_cols % c == 0:
            best = c
        c += 128
    return best


# ---------------------------------------------------------------------------
# Wrapper
# ---------------------------------------------------------------------------
def positional_encoding_forward(x, pe, *, dropout_ratio=0.1, training=False,
                                rng_key=None, tile_budget_bytes=8 << 20):
    """x: (B, S, D); pe: (max_len, D). Returns x + pe[:S] (+ dropout if training)."""
    B, S, D = x.shape
    SD = S * D

    # Lane-dense 2-D views: last dim is S*D (multiple of 128 for typical shapes).
    x2 = x.reshape(B, SD)
    pe2 = pe[:S].astype(x.dtype).reshape(1, SD)     # cast once, outside the kernel

    use_dropout = bool(training) and float(dropout_ratio) > 0.0

    itemsize = x2.dtype.itemsize
    # per-column working set (one buffer): x tile + out tile (+ uint32 bits) + pe row
    bytes_per_col = B * itemsize * 2 + (B * 4 if use_dropout else 0) + itemsize
    cb = _pick_col_tile(SD, bytes_per_col, tile_budget_bytes)
    grid = (SD // cb,)

    row_spec = pl.BlockSpec((B, cb), lambda c: (0, c))   # x / bits / out tiles
    pe_spec = pl.BlockSpec((1, cb), lambda c: (0, c))    # pe row tile (broadcast in-kernel)
    out_shape = jax.ShapeDtypeStruct((B, SD), x.dtype)
    cparams = pltpu.CompilerParams(dimension_semantics=("parallel",))

    if use_dropout:
        if rng_key is None:
            rng_key = jax.random.PRNGKey(0)
        # Random bits generated outside the kernel (deterministic, independent of
        # tile size, and runs on both real TPU and the interpret backend).
        bits = jax.random.bits(rng_key, (B, SD), dtype=jnp.uint32)
        threshold = min(int(round(float(dropout_ratio) * (1 << 32))), (1 << 32) - 1)
        scale = 1.0 / (1.0 - float(dropout_ratio))
        kernel = functools.partial(_pe_add_dropout_kernel, threshold, scale)
        out2 = pl.pallas_call(
            kernel, out_shape=out_shape, grid=grid,
            in_specs=[row_spec, pe_spec, row_spec], out_specs=row_spec,
            compiler_params=cparams,
        )(x2, pe2, bits)
    else:
        out2 = pl.pallas_call(
            _pe_add_kernel, out_shape=out_shape, grid=grid,
            in_specs=[row_spec, pe_spec], out_specs=row_spec,
            compiler_params=cparams,
        )(x2, pe2)

    return out2.reshape(B, S, D)


# ---------------------------------------------------------------------------
# Demo / self-check
# ---------------------------------------------------------------------------
if __name__ == "__main__":
    B, S, D = 2, 8, 32          # batch=2, seq=8, d_model=32
    MAX_LEN = 5000
    DROPOUT = 0.1

    key = jax.random.PRNGKey(0)
    x = jax.random.normal(key, (B, S, D), dtype=jnp.float32)
    pe = make_positional_encoding(D, max_len=MAX_LEN)

    # eval-mode forward (dropout == identity) — exact check vs reference
    out_eval = positional_encoding_forward(x, pe, dropout_ratio=DROPOUT, training=False)
    out_eval = jax.block_until_ready(out_eval)
    ref = x + pe[None, :S, :]
    assert out_eval.shape == x.shape and out_eval.dtype == x.dtype
    assert jnp.allclose(out_eval, ref, atol=1e-6, rtol=1e-6), "eval-mode mismatch"

    # training-mode forward (inverted dropout applied inside the kernel)
    out_train = positional_encoding_forward(
        x, pe, dropout_ratio=DROPOUT, training=True, rng_key=jax.random.PRNGKey(1234))
    out_train = jax.block_until_ready(out_train)
    assert out_train.shape == x.shape
    # dropped elements are exactly zero; kept elements equal ref / (1 - p)
    kept = out_train != 0.0
    assert jnp.allclose(jnp.where(kept, out_train, 0.0),
                        jnp.where(kept, ref / (1.0 - DROPOUT), 0.0),
                        atol=1e-5, rtol=1e-5), "training-mode kept-value mismatch"
    frac_kept = jnp.mean(kept.astype(jnp.float32))
    assert 0.5 < float(frac_kept) < 1.0, "dropout keep fraction implausible"

    print("KERNEL_OK")
</pallas_src>

<mosaic_0001>
module attributes {stable_mosaic.version = 11 : i64} {
  func.func @_pe_add_kernel(%arg0: i32, %arg1: memref<2x256xf32, #tpu.memory_space<vmem>>, %arg2: memref<1x256xf32, #tpu.memory_space<vmem>>, %arg3: memref<2x256xf32, #tpu.memory_space<vmem>>) attributes {dimension_semantics = [#tpu.dimension_semantics<parallel>], iteration_bounds = array<i64: 1>, scalar_prefetch = 0 : i64, scratch_operands = 0 : i64, tpu.core_type = #tpu.core_type<tc>, window_params = [{transform_indices = @transform_0, window_bounds = array<i64: 2, 256>}, {transform_indices = @transform_1, window_bounds = array<i64: 1, 256>}, {transform_indices = @transform_2, window_bounds = array<i64: 2, 256>}]} {
    %c0 = arith.constant 0 : index
    %c0_0 = arith.constant 0 : index
    %0 = vector.load %arg1[%c0, %c0_0] : memref<2x256xf32, #tpu.memory_space<vmem>>, vector<2x256xf32>
    %c0_1 = arith.constant 0 : index
    %c0_2 = arith.constant 0 : index
    %1 = vector.load %arg2[%c0_1, %c0_2] : memref<1x256xf32, #tpu.memory_space<vmem>>, vector<1x256xf32>
    %2 = vector.broadcast %1 : vector<1x256xf32> to vector<2x256xf32>
    %3 = arith.addf %0, %2 : vector<2x256xf32>
    %c0_3 = arith.constant 0 : index
    %c0_4 = arith.constant 0 : index
    %4 = vector.load %arg3[%c0_3, %c0_4] : memref<2x256xf32, #tpu.memory_space<vmem>>, vector<2x256xf32>
    tpu.vector_store %arg3[%c0_3, %c0_4], %3 {strides = array<i32>} : memref<2x256xf32, #tpu.memory_space<vmem>>, vector<2x256xf32>,
    return
  }
  func.func @transform_0(%arg0: i32) -> (i32, i32) {
    %c0_i32 = arith.constant 0 : i32
    %c0_i32_0 = arith.constant 0 : i32
    return %c0_i32, %arg0 : i32, i32
  }
  func.func @transform_1(%arg0: i32) -> (i32, i32) {
    %c0_i32 = arith.constant 0 : i32
    %c0_i32_0 = arith.constant 0 : i32
    return %c0_i32, %arg0 : i32, i32
  }
  func.func @transform_2(%arg0: i32) -> (i32, i32) {
    %c0_i32 = arith.constant 0 : i32
    %c0_i32_0 = arith.constant 0 : i32
    return %c0_i32, %arg0 : i32, i32
  }
}

</mosaic_0001>

<llo_original>
// kernel: tpu_custom_call.1
$region0: #{tpu_custom_call.1}
  #allocation0 [shape = 'u32[]', space=smem, size = 0x4, offset = 0x4, fixed_abs, tag = 'smem constant byte address 0x4 - core index']
  #allocation1 [shape = 'u32[144,128]{1,0:T(1,128)}', space=vmem, size = 0x12000, scoped, tag = 'internal scratch']
  %s0 = inlined_call_operand.hbm [shape: f32[2,256], index: 0, kind: input, shape index: {}]
  %s1 = inlined_call_operand.vmem [shape: f32[1,256], index: 1, kind: input, shape index: {}]
  %s2 = inlined_call_operand.hbm [shape: f32[2,256], index: 2, kind: output, shape index: {}]
  %s3 = sld [smem:[#allocation0]]
  $region22: #{tpu_custom_call.1} parent=0
    _
  %s5 = ssub.s32 1, %s3
  %s6 = scalar_select 0, %s5, %s3
  $region1: #{tpu_custom_call.1} parent=0
    #allocation2 [shape = 'u8[2048]{0}', space=vmem, size = 0x800, scoped, tag = 'input window, operand 0, single buffered']
    #allocation3 [shape = 's32[1]{0}', space=sflag, size = 0x4, scoped, tag = 'scoped memory for tpu_custom_call.1']
    #allocation4 [shape = 's32[1]{0}', space=sflag, size = 0x4, scoped, tag = 'scoped memory for tpu_custom_call.1']
    #allocation5 [shape = 'u8[2048]{0}', space=vmem, size = 0x800, scoped, tag = 'output window, operand 0, single buffered']
    %7 = vsyncpa [#allocation3], 0
    %8 = vsyncpa [#allocation4], 0
    // Predicated region
    $region2: #{tpu_custom_call.1} parent=1 // pred_check
      _
    $region3: #{tpu_custom_call.1} parent=1 // pred_check_branch
      %10 = sbr.rel (0) target = $region5
    $region4: #{tpu_custom_call.1} parent=1 // pred_region
      %s12 = ssub.s32 64, 64
      %13 = vsyncadd [#allocation3], %s12
      %s15 = sshll.u32 [#allocation2], 4
      %s16 = int_to_ptr.vmem [resolvable:$true] %s15
      %18 = dma.hbm_to_vmem [thread:$0]  %s0, 64, %s16, [#allocation3]
    $region5: #{tpu_custom_call.1} parent=1 // pred_fallthru
      _
    // Predicated region
    $region6: #{tpu_custom_call.1} parent=1 // pred_check
      _
    $region7: #{tpu_custom_call.1} parent=1 // pred_check_branch
      %20 = sbr.rel (0) target = $region9
    $region8: #{tpu_custom_call.1} parent=1 // pred_region
      _
    $region9: #{tpu_custom_call.1} parent=1 // pred_fallthru
      _
    // Predicated region
    $region10: #{tpu_custom_call.1} parent=1 // pred_check
      _
    $region11: #{tpu_custom_call.1} parent=1 // pred_check_branch
      %22 = sbr.rel (0) target = $region13
    $region12: #{tpu_custom_call.1} parent=1 // pred_region
      %23 = dma.done [#allocation3], 64
    $region13: #{tpu_custom_call.1} parent=1 // pred_fallthru
      _
    %v24 = vld [vmem:[#allocation2] sm:$0xf]
    %v25 = vld [vmem:[%s1] sm:$0x3]
    %v27 = vlaneseq
    %v28 = vshrl.u32 %v27, 7
    %v29 = vsub.s32 0, %v28
    %v30 = vrot.slane %v25, %v29
    %v31 = vlaneseq
    %v32 = vshrl.u32 %v31, 7
    %v33 = vsub.s32 1, %v32
    %v34 = vrot.slane %v25, %v33
    %v35 = vcombine.low %v30, %v34
    %v37 = vunpack.c.l.s4 1983009808
    %v38 = vunpack.c.0.s8 %v37
    %v39 = vlaneseq
    %v40 = vshrl.u32 %v39, 7
    %v41 = vsub.s32 %v38, %v40
    %v42 = vrot.slane %v35, %v41
    %v44 = vadd.f32 %v24, %v42
    %45 = vst [vmem:[#allocation5] sm:$0xf] %v44
    // Predicated region
    $region14: #{tpu_custom_call.1} parent=1 // pred_check
      _
    $region15: #{tpu_custom_call.1} parent=1 // pred_check_branch
      %47 = sbr.rel (0) target = $region17
    $region16: #{tpu_custom_call.1} parent=1 // pred_region
      %s49 = ssub.s32 64, 64
      %50 = vsyncadd [#allocation4], %s49
      %s52 = sshll.u32 [#allocation5], 4
      %s53 = int_to_ptr.vmem [resolvable:$true] %s52
      %55 = dma.vmem_to_hbm [thread:$0]  %s53, 64, %s2, [#allocation4]
    $region17: #{tpu_custom_call.1} parent=1 // pred_fallthru
      _
    // Predicated region
    $region18: #{tpu_custom_call.1} parent=1 // pred_check
      _
    $region19: #{tpu_custom_call.1} parent=1 // pred_check_branch
      %57 = sbr.rel (0) target = $region21
    $region20: #{tpu_custom_call.1} parent=1 // pred_region
      %58 = dma.done [#allocation4], 64
    $region21: #{tpu_custom_call.1} parent=1 // pred_fallthru
      _
    %59 = vsyncpa [#allocation3], 1
    %60 = vsyncpa [#allocation4], 1

</llo_original>
